<compile_context>
chip_gen: v7x
topology: tpu7x:2x2x1
jax: 0.10.0
libtpu: 0.0.40
codegen_flags: <defaults>
</compile_context>

<pallas_src>
import jax
import jax.numpy as jnp
from jax.experimental import pallas as pl
from jax.experimental.pallas import tpu as pltpu


# Below ~1M elements the custom-call boundary + lost XLA fusion outweigh any
# pipelining benefit; use the plain fused compare instead.
_MIN_PALLAS_ELEMS = 1 << 20

# Preferred lane widths (multiples of 128), tried in order; fallback pad width.
_LANE_CANDIDATES = (1024, 512, 256, 128)
_PAD_LANE = 1024


def _round_up(x, m):
    return ((x + m - 1) // m) * m


def _generation_budget():
    """Returns (combined in+out bytes per grid step, vmem_limit_bytes or None)."""
    try:
        kind = jax.devices()[0].device_kind.lower()
    except Exception:  # pragma: no cover - defensive; fall back to safe sizing
        kind = ""
    if ("v2" in kind) or ("v3" in kind) or ("v4" in kind) or ("v5" in kind):
        # v5e & older: 16 MiB default scoped VMEM -> 4 MiB/step
        # (2 arrays x 2 buffers -> 8 MiB resident).
        return 4 << 20, None
    if "v6" in kind:
        # v6e: 32 MiB default scoped VMEM -> 8 MiB/step (16 MiB resident).
        return 8 << 20, None
    if "7" in kind:
        # v7x: 64 MiB physical VMEM/TC -> 16 MiB/step (32 MiB resident),
        # raise the scoped limit above the 32 MiB default but stay << 64 MiB.
        return 16 << 20, 48 << 20
    # Unknown / future chips: v6e-style sizing is safe everywhere.
    return 8 << 20, None


def _heaviside_kernel(x_ref, o_ref):
    # Elementwise heaviside: (x > 0) -> out dtype, full tile at once (VPU).
    o_ref[...] = (x_ref[...] > 0).astype(o_ref.dtype)


def _heaviside_pallas_2d(x2d, out_dtype):
    """Tiled, pipelined elementwise heaviside over a (rows, lane) slab."""
    rows, lane = x2d.shape
    in_b = jnp.dtype(x2d.dtype).itemsize
    out_b = jnp.dtype(out_dtype).itemsize
    step_budget, vmem_limit = _generation_budget()

    # Rows per block from the per-step byte budget (in block + out block),
    # rounded down to a sublane multiple.
    max_block_rows = max(8, (step_budget // (lane * (in_b + out_b))) // 8 * 8)

    if rows < 16:
        # Single full-extent block (block dim == array dim is always legal).
        block_rows = rows
    else:
        # Guarantee >= 2 grid steps so v7x megacore can split the sweep,
        # capped by the VMEM budget.
        block_rows = min(max_block_rows, _round_up(pl.cdiv(rows, 2), 8))
        block_rows = max(8, block_rows)

    grid = (pl.cdiv(rows, block_rows),)

    params = dict(dimension_semantics=("parallel",))
    if vmem_limit is not None:
        params["vmem_limit_bytes"] = vmem_limit

    n = rows * lane
    return pl.pallas_call(
        _heaviside_kernel,
        out_shape=jax.ShapeDtypeStruct((rows, lane), out_dtype),
        grid_spec=pl.GridSpec(
            grid=grid,
            in_specs=[pl.BlockSpec((block_rows, lane), lambda i: (i, 0))],
            out_specs=pl.BlockSpec((block_rows, lane), lambda i: (i, 0)),
        ),
        compiler_params=pltpu.CompilerParams(**params),
        cost_estimate=pl.CostEstimate(
            flops=n,
            transcendentals=0,
            bytes_accessed=n * (in_b + out_b),
        ),
    )(x2d)


def surrogate_dyt_forward(x, alpha_param, gamma_param, *,
                          out_dtype=jnp.float32,
                          min_pallas_elems=_MIN_PALLAS_ELEMS):
    """JAX/Pallas equivalent of surrogate_dyt.forward.

    x:            (..., input_size) array
    alpha_param:  (input_size,) raw parameter (softplus applied here)
    gamma_param:  (input_size,) raw parameter (softplus applied here)
    out_dtype:    defaults to float32 to match PyTorch's `.float()`; callers
                  may opt into a narrower dtype (e.g. bf16) to cut store
                  bandwidth, values are exactly 0/1 so nothing is lost.
    returns:      out_dtype array, shape of x, values (x > 0); x==0 and NaN
                  map to 0 exactly like PyTorch's (x > 0).float().
    """
    # Parameter glue identical to the PyTorch module.  The forward output does
    # not depend on these; they would be residuals of a future custom_vjp.
    alpha = jax.nn.softplus(alpha_param)
    gamma = jax.nn.softplus(gamma_param)
    del alpha, gamma  # TODO(synk): keep as residuals when backward is added.

    n = int(x.size)
    if n == 0:
        return jnp.zeros(x.shape, out_dtype)

    # Largest lane-dense width that divides n exactly (no pad/slice copies).
    lane = next((c for c in _LANE_CANDIDATES if n % c == 0), None)

    # Ragged case needs a pad + trailing-slice round trip around the custom
    # call (extra HBM traffic), so demand ~4x more work before using Pallas.
    eff_min = min_pallas_elems if lane is not None else 4 * max(min_pallas_elems, 1)
    if n < eff_min:
        # Tiny tensors: let XLA fuse the compare; Pallas is pure overhead here.
        return (x > 0).astype(out_dtype)

    orig_shape = x.shape
    if lane is not None:
        out2d = _heaviside_pallas_2d(x.reshape(n // lane, lane), out_dtype)
        return out2d.reshape(orig_shape)

    # Fallback for element counts with no 128-multiple factor: pad the
    # flattened tensor to a multiple of _PAD_LANE, run, slice off the tail.
    rows = pl.cdiv(n, _PAD_LANE)
    padded = rows * _PAD_LANE
    x_flat = jnp.pad(x.reshape(-1), (0, padded - n))
    out2d = _heaviside_pallas_2d(x_flat.reshape(rows, _PAD_LANE), out_dtype)
    return out2d.reshape(-1)[:n].reshape(orig_shape)


if __name__ == "__main__":
    key = jax.random.PRNGKey(0)
    k1, k2, k3 = jax.random.split(key, 3)

    # Small shape consistent with the module (hidden == input_size).
    batch, seq, hidden = 2, 8, 32
    x_small = jax.random.normal(k1, (batch, seq, hidden), dtype=jnp.float32)
    alpha_p = jnp.ones((hidden,), dtype=jnp.float32) * 2.0
    gamma_p = jnp.ones((hidden,), dtype=jnp.float32)

    # (a) Default dispatch: tiny input takes the fused plain-JAX fast path.
    out_small = surrogate_dyt_forward(x_small, alpha_p, gamma_p)
    # (b) Force the Pallas kernel on the same small input (divisor slab path).
    out_small_pallas = surrogate_dyt_forward(
        x_small, alpha_p, gamma_p, min_pallas_elems=0)

    # (c) A modest slab that exercises the tiled, multi-step pipelined grid
    #     (4*512*512 = 1M elems -> lane=1024, >=2 grid steps).
    hidden2 = 512
    x_big = jax.random.normal(k2, (4, 512, hidden2), dtype=jnp.float32)
    alpha2 = jnp.ones((hidden2,), dtype=jnp.float32) * 2.0
    gamma2 = jnp.ones((hidden2,), dtype=jnp.float32)
    out_big = surrogate_dyt_forward(x_big, alpha2, gamma2)

    # (d) Small ragged shape forced through the pad-fallback Pallas path.
    hidden3 = 33
    x_ragged = jax.random.normal(k3, (3, 7, hidden3), dtype=jnp.bfloat16)
    alpha3 = jnp.ones((hidden3,), dtype=jnp.float32) * 2.0
    gamma3 = jnp.ones((hidden3,), dtype=jnp.float32)
    out_ragged = surrogate_dyt_forward(
        x_ragged, alpha3, gamma3, min_pallas_elems=0)

    jax.block_until_ready((out_small, out_small_pallas, out_big, out_ragged))

    ref_small = (x_small > 0).astype(jnp.float32)
    ref_big = (x_big > 0).astype(jnp.float32)
    ref_ragged = (x_ragged > 0).astype(jnp.float32)

    assert out_small.shape == x_small.shape and out_small.dtype == jnp.float32
    assert out_small_pallas.shape == x_small.shape
    assert out_small_pallas.dtype == jnp.float32
    assert out_big.shape == x_big.shape and out_big.dtype == jnp.float32
    assert out_ragged.shape == x_ragged.shape and out_ragged.dtype == jnp.float32
    assert bool(jnp.all(out_small == ref_small))
    assert bool(jnp.all(out_small_pallas == ref_small))
    assert bool(jnp.all(out_big == ref_big))
    assert bool(jnp.all(out_ragged == ref_ragged))

    print("KERNEL_OK")
</pallas_src>

<mosaic_0001>
module attributes {stable_mosaic.version = 11 : i64} {
  func.func @_heaviside_kernel(%arg0: i32, %arg1: memref<1x512xf32, #tpu.memory_space<vmem>>, %arg2: memref<1x512xf32, #tpu.memory_space<vmem>>) attributes {dimension_semantics = [#tpu.dimension_semantics<parallel>], iteration_bounds = array<i64: 1>, scalar_prefetch = 0 : i64, scratch_operands = 0 : i64, tpu.core_type = #tpu.core_type<tc>, window_params = [{transform_indices = @transform_0, window_bounds = array<i64: 1, 512>}, {transform_indices = @transform_1, window_bounds = array<i64: 1, 512>}]} {
    %c0 = arith.constant 0 : index
    %c0_0 = arith.constant 0 : index
    %0 = vector.load %arg1[%c0, %c0_0] : memref<1x512xf32, #tpu.memory_space<vmem>>, vector<1x512xf32>
    %cst = arith.constant 0.000000e+00 : f32
    %1 = vector.broadcast %cst : f32 to vector<1x512xf32>
    %2 = arith.cmpf ogt, %0, %1 : vector<1x512xf32>
    %3 = arith.extui %2 : vector<1x512xi1> to vector<1x512xi32>
    %4 = arith.sitofp %3 : vector<1x512xi32> to vector<1x512xf32>
    %c0_1 = arith.constant 0 : index
    %c0_2 = arith.constant 0 : index
    %5 = vector.load %arg2[%c0_1, %c0_2] : memref<1x512xf32, #tpu.memory_space<vmem>>, vector<1x512xf32>
    tpu.vector_store %arg2[%c0_1, %c0_2], %4 {strides = array<i32>} : memref<1x512xf32, #tpu.memory_space<vmem>>, vector<1x512xf32>,
    return
  }
  func.func @transform_0(%arg0: i32) -> (i32, i32) {
    %c0_i32 = arith.constant 0 : i32
    %c0_i32_0 = arith.constant 0 : i32
    return %arg0, %c0_i32 : i32, i32
  }
  func.func @transform_1(%arg0: i32) -> (i32, i32) {
    %c0_i32 = arith.constant 0 : i32
    %c0_i32_0 = arith.constant 0 : i32
    return %arg0, %c0_i32 : i32, i32
  }
}

</mosaic_0001>

<llo_original>
// kernel: tpu_custom_call.1
$region0: #{tpu_custom_call.1}
  #allocation0 [shape = 'u32[]', space=smem, size = 0x4, offset = 0x4, fixed_abs, tag = 'smem constant byte address 0x4 - core index']
  #allocation1 [shape = 'u32[144,128]{1,0:T(1,128)}', space=vmem, size = 0x12000, scoped, tag = 'internal scratch']
  %s0 = inlined_call_operand.hbm [shape: f32[1,512], index: 0, kind: input, shape index: {}]
  %s1 = inlined_call_operand.hbm [shape: f32[1,512], index: 1, kind: output, shape index: {}]
  %s2 = sld [smem:[#allocation0]]
  $region18: #{tpu_custom_call.1} parent=0
    _
  %s4 = ssub.s32 1, %s2
  %s5 = scalar_select 0, %s4, %s2
  $region1: #{tpu_custom_call.1} parent=0
    #allocation2 [shape = 'u8[2048]{0}', space=vmem, size = 0x800, scoped, tag = 'input window, operand 0, single buffered']
    #allocation3 [shape = 's32[1]{0}', space=sflag, size = 0x4, scoped, tag = 'scoped memory for tpu_custom_call.1']
    #allocation4 [shape = 's32[1]{0}', space=sflag, size = 0x4, scoped, tag = 'scoped memory for tpu_custom_call.1']
    #allocation5 [shape = 'u8[2048]{0}', space=vmem, size = 0x800, scoped, tag = 'output window, operand 0, single buffered']
    %6 = vsyncpa [#allocation3], 0
    %7 = vsyncpa [#allocation4], 0
    // Predicated region
    $region2: #{tpu_custom_call.1} parent=1 // pred_check
      _
    $region3: #{tpu_custom_call.1} parent=1 // pred_check_branch
      %9 = sbr.rel (0) target = $region5
    $region4: #{tpu_custom_call.1} parent=1 // pred_region
      %s11 = ssub.s32 64, 64
      %12 = vsyncadd [#allocation3], %s11
      %s14 = sshll.u32 [#allocation2], 4
      %s15 = int_to_ptr.vmem [resolvable:$true] %s14
      %17 = dma.hbm_to_vmem [thread:$0]  %s0, 64, %s15, [#allocation3]
    $region5: #{tpu_custom_call.1} parent=1 // pred_fallthru
      _
    // Predicated region
    $region6: #{tpu_custom_call.1} parent=1 // pred_check
      _
    $region7: #{tpu_custom_call.1} parent=1 // pred_check_branch
      %19 = sbr.rel (0) target = $region9
    $region8: #{tpu_custom_call.1} parent=1 // pred_region
      %20 = dma.done [#allocation3], 64
    $region9: #{tpu_custom_call.1} parent=1 // pred_fallthru
      _
    %v21 = vld [vmem:[#allocation2] sm:$0xf]
    %vm22 = vcmp.gt.f32.partialorder %v21, 0.0
    %v23 = vsel %vm22, 1, 0
    %v24 = vcvt.s32.f32 %v23
    %v25 = vlaneseq
    %vm26 = vcmp.ge.s32.totalorder %v25, 0
    %vm27 = vcmp.lt.s32.totalorder %v25, 512
    %vm28 = vmand %vm26, %vm27
    %29 = vst.msk [vmem:[#allocation5] sm:$0xf] %vm28, %v24
    // Predicated region
    $region10: #{tpu_custom_call.1} parent=1 // pred_check
      _
    $region11: #{tpu_custom_call.1} parent=1 // pred_check_branch
      %31 = sbr.rel (0) target = $region13
    $region12: #{tpu_custom_call.1} parent=1 // pred_region
      %s33 = ssub.s32 64, 64
      %34 = vsyncadd [#allocation4], %s33
      %s36 = sshll.u32 [#allocation5], 4
      %s37 = int_to_ptr.vmem [resolvable:$true] %s36
      %39 = dma.vmem_to_hbm [thread:$0]  %s37, 64, %s1, [#allocation4]
    $region13: #{tpu_custom_call.1} parent=1 // pred_fallthru
      _
    // Predicated region
    $region14: #{tpu_custom_call.1} parent=1 // pred_check
      _
    $region15: #{tpu_custom_call.1} parent=1 // pred_check_branch
      %41 = sbr.rel (0) target = $region17
    $region16: #{tpu_custom_call.1} parent=1 // pred_region
      %42 = dma.done [#allocation4], 64
    $region17: #{tpu_custom_call.1} parent=1 // pred_fallthru
      _
    %43 = vsyncpa [#allocation3], 1
    %44 = vsyncpa [#allocation4], 1

</llo_original>
